<compile_context>
chip_gen: v5e
topology: v5e:2x2
jax: 0.10.0
libtpu: 0.0.40
codegen_flags: <defaults>
</compile_context>

<pallas_src>
import numpy as np
import jax
import jax.numpy as jnp
from jax.experimental import pallas as pl
from jax.experimental.pallas import tpu as pltpu

_LANE = 128   # TPU lane width
_SUB = 8      # sublane granularity (f32)


def _round_up(n, m):
    return ((n + m - 1) // m) * m


def _make_kernel(x_dim, cdim, offsets, L):
    """Build the fused kernel with static row offsets baked in."""
    r_w1x, r_w1c, r_b1, r_w2, r_b2 = offsets

    if cdim > 0:
        def kernel(x_ref, c_ref, w_ref, out_ref):
            # Split-K first layer: concat(x, context) @ W1 == x @ W1x + c @ W1c.
            h = (jnp.dot(x_ref[...], w_ref[r_w1x:r_w1x + x_dim, :],
                         preferred_element_type=jnp.float32)
                 + jnp.dot(c_ref[...], w_ref[r_w1c:r_w1c + cdim, :],
                           preferred_element_type=jnp.float32)
                 + w_ref[r_b1:r_b1 + 1, :])
            h = jnp.maximum(h, 0.0)                                   # ReLU on VPU
            out = (jnp.dot(h, w_ref[r_w2:r_w2 + L, :],
                           preferred_element_type=jnp.float32)
                   + w_ref[r_b2:r_b2 + 1, :])
            out_ref[...] = out.astype(out_ref.dtype)                  # lane-dense store
    else:
        def kernel(x_ref, w_ref, out_ref):
            h = (jnp.dot(x_ref[...], w_ref[r_w1x:r_w1x + x_dim, :],
                         preferred_element_type=jnp.float32)
                 + w_ref[r_b1:r_b1 + 1, :])
            h = jnp.maximum(h, 0.0)
            out = (jnp.dot(h, w_ref[r_w2:r_w2 + L, :],
                           preferred_element_type=jnp.float32)
                   + w_ref[r_b2:r_b2 + 1, :])
            out_ref[...] = out.astype(out_ref.dtype)

    return kernel


def pack_params_module_list(w1, b1, w2, b2, x_dim):
    """One-time host-side packing into a single lane-dense [R, 128k] slab.

    w1: [M, Din, H], b1: [M, 1, H], w2: [M, H, Dout], b2: [M, 1, Dout]
    x_dim: feature dim of x (Din - x_dim is the context dim).

    Slab row layout (each block starts on an 8-aligned row):
      [W1x (x_dim rows) | W1c (cdim rows) | b1 (1 row) | W2 block-diag (L rows) | b2 (1 row)]
    W2/b2 columns are ordered [all means | all log_scales] so the wrapper needs
    only two output slices.  All padding is zero, so padded units contribute 0.
    """
    w1 = np.asarray(w1, np.float32)
    b1 = np.asarray(b1, np.float32)
    w2 = np.asarray(w2, np.float32)
    b2 = np.asarray(b2, np.float32)

    M, Din, H = w1.shape
    Dout = w2.shape[2]
    P = Dout // 2
    cdim = Din - x_dim
    assert cdim >= 0

    Hp = _round_up(M * H, _LANE)
    Np = _round_up(M * Dout, _LANE)
    L = max(Hp, Np)

    r_w1x = 0
    r_w1c = r_w1x + _round_up(x_dim, _SUB)
    r_b1 = r_w1c + _round_up(cdim, _SUB)
    r_w2 = r_b1 + _SUB
    r_b2 = r_w2 + L
    R = r_b2 + _SUB

    slab = np.zeros((R, L), np.float32)
    for m in range(M):
        slab[r_w1x:r_w1x + x_dim, m * H:(m + 1) * H] = w1[m, :x_dim, :]
        if cdim > 0:
            slab[r_w1c:r_w1c + cdim, m * H:(m + 1) * H] = w1[m, x_dim:, :]
        slab[r_b1, m * H:(m + 1) * H] = b1[m, 0, :]
        # Block-diagonal W2 with [means | log_scales] column ordering.
        slab[r_w2 + m * H:r_w2 + (m + 1) * H, m * P:(m + 1) * P] = w2[m, :, :P]
        slab[r_w2 + m * H:r_w2 + (m + 1) * H,
             M * P + m * P:M * P + (m + 1) * P] = w2[m, :, P:]
        slab[r_b2, m * P:(m + 1) * P] = b2[m, 0, :P]
        slab[r_b2, M * P + m * P:M * P + (m + 1) * P] = b2[m, 0, P:]

    meta = dict(M=M, H=H, Dout=Dout, P=P, x_dim=x_dim, cdim=cdim, L=L,
                offsets=(r_w1x, r_w1c, r_b1, r_w2, r_b2))
    return jnp.asarray(slab), meta


def params_module_list_forward(x, context, packed):
    """Pallas equivalent of ParamsModuleList.forward.

    Returns a list (len M) of (mean, log_scale) tuples, each [batch, dim],
    matching the PyTorch module's per-module return structure.
    """
    slab, meta = packed
    M, P, L = meta["M"], meta["P"], meta["L"]
    x_dim, cdim = meta["x_dim"], meta["cdim"]
    offsets = meta["offsets"]
    R = slab.shape[0]

    assert x.shape[-1] == x_dim
    x = x.astype(jnp.float32)
    if cdim > 0:
        assert context is not None and context.shape[-1] == cdim
        context = context.astype(jnp.float32)

    B = x.shape[0]
    TB_MAX = 512                       # measured HBM-roofline plateau starts ~512 rows
    tb = B if B <= TB_MAX else TB_MAX
    B_pad = B if B <= tb else _round_up(B, tb)
    if B_pad != B:
        x = jnp.pad(x, ((0, B_pad - B), (0, 0)))
        if cdim > 0:
            context = jnp.pad(context, ((0, B_pad - B), (0, 0)))

    kernel = _make_kernel(x_dim, cdim, offsets, L)

    x_spec = pl.BlockSpec((tb, x_dim), lambda i: (i, 0))
    w_spec = pl.BlockSpec((R, L), lambda i: (0, 0))      # constant: weights DMA'd once
    out_spec = pl.BlockSpec((tb, L), lambda i: (i, 0))

    if cdim > 0:
        in_specs = [x_spec, pl.BlockSpec((tb, cdim), lambda i: (i, 0)), w_spec]
        args = (x, context, slab)
    else:
        in_specs = [x_spec, w_spec]
        args = (x, slab)

    # Double-buffered activation blocks + single weight slab, with headroom;
    # explicit so v5e's 16 MiB scoped default never bites at tb=512.
    vmem_est = 4 * (2 * tb * (x_dim + cdim + L) + 2 * R * L)
    vmem_limit = min(max(2 * vmem_est, 32 << 20), 48 << 20)

    out = pl.pallas_call(
        kernel,
        out_shape=jax.ShapeDtypeStruct((B_pad, L), jnp.float32),
        grid=(B_pad // tb,),
        in_specs=in_specs,
        out_specs=out_spec,
        compiler_params=pltpu.CompilerParams(
            dimension_semantics=("parallel",),   # v7x: shard batch grid across 2 TCs
            vmem_limit_bytes=vmem_limit),
    )(*args)

    # Two slices + reshape (output columns were packed as [means | log_scales]).
    MP = M * P
    means = out[:B, :MP].reshape(B, M, P)
    log_scales = out[:B, MP:2 * MP].reshape(B, M, P)
    return [(means[:, m, :], log_scales[:, m, :]) for m in range(M)]


def _reference_forward(x, weights, context=None):
    w1, b1, w2, b2 = weights
    if context is not None:
        x = jnp.concatenate([x, context], axis=-1)
    outs = []
    P = w2.shape[2] // 2
    for i in range(w1.shape[0]):
        h = jnp.maximum(x @ w1[i] + b1[i], 0.0)
        o = h @ w2[i] + b2[i]
        outs.append((o[:, :P], o[:, P:]))
    return outs


if __name__ == "__main__":
    num_modules = 3
    batch = 8
    dim = 16          # event dim of the flow; each module emits (mean, log_scale)
    context_dim = 8
    hidden = 32
    din = dim + context_dim
    dout = 2 * dim

    key = jax.random.PRNGKey(0)
    kx, kc, kw1, kb1, kw2, kb2 = jax.random.split(key, 6)

    x = jax.random.normal(kx, (batch, dim), dtype=jnp.float32)
    context = jax.random.normal(kc, (batch, context_dim), dtype=jnp.float32)

    # Synthetic ParamsModule weights (deterministic).
    w1 = 0.1 * jax.random.normal(kw1, (num_modules, din, hidden), dtype=jnp.float32)
    b1 = 0.1 * jax.random.normal(kb1, (num_modules, 1, hidden), dtype=jnp.float32)
    w2 = 0.1 * jax.random.normal(kw2, (num_modules, hidden, dout), dtype=jnp.float32)
    b2 = 0.1 * jax.random.normal(kb2, (num_modules, 1, dout), dtype=jnp.float32)

    # One-time host-side packing into a single lane-dense slab.
    packed = pack_params_module_list(w1, b1, w2, b2, x_dim=dim)

    outs = params_module_list_forward(x, context, packed)
    outs = jax.block_until_ready(outs)

    # Sanity check against a plain-JAX reference.
    ref = _reference_forward(x, (w1, b1, w2, b2), context=context)
    for (m_o, s_o), (m_r, s_r) in zip(outs, ref):
        assert m_o.shape == (batch, dim) and s_o.shape == (batch, dim)
        assert jnp.allclose(m_o, m_r, atol=1e-5)
        assert jnp.allclose(s_o, s_r, atol=1e-5)

    print("KERNEL_OK")
</pallas_src>

<mosaic_0001>
module attributes {stable_mosaic.version = 11 : i64} {
  func.func @kernel(%arg0: i32, %arg1: memref<8x16xf32, #tpu.memory_space<vmem>>, %arg2: memref<8x8xf32, #tpu.memory_space<vmem>>, %arg3: memref<168x128xf32, #tpu.memory_space<vmem>>, %arg4: memref<8x128xf32, #tpu.memory_space<vmem>>) attributes {dimension_semantics = [#tpu.dimension_semantics<parallel>], iteration_bounds = array<i64: 1>, scalar_prefetch = 0 : i64, scratch_operands = 0 : i64, tpu.core_type = #tpu.core_type<tc>, window_params = [{transform_indices = @transform_0, window_bounds = array<i64: 8, 16>}, {transform_indices = @transform_1, window_bounds = array<i64: 8, 8>}, {pipeline_mode = #tpu.pipeline_mode<synchronous>, transform_indices = @transform_2, window_bounds = array<i64: 168, 128>}, {transform_indices = @transform_3, window_bounds = array<i64: 8, 128>}]} {
    %c0 = arith.constant 0 : index
    %c0_0 = arith.constant 0 : index
    %0 = vector.load %arg1[%c0, %c0_0] : memref<8x16xf32, #tpu.memory_space<vmem>>, vector<8x16xf32>
    %c0_1 = arith.constant 0 : index
    %c0_2 = arith.constant 0 : index
    %1 = vector.load %arg3[%c0_1, %c0_2] : memref<168x128xf32, #tpu.memory_space<vmem>>, vector<16x128xf32>
    %cst = arith.constant dense<0.000000e+00> : vector<8x128xf32>
    %2 = tpu.matmul %0, %1, %cst {dimension_numbers = #tpu.dot_dimension_numbers<[1], [0], [0], [1], [0, 0, 1, 1], [], []>} : vector<8x16xf32>, vector<16x128xf32>, vector<8x128xf32> -> vector<8x128xf32>
    %c0_3 = arith.constant 0 : index
    %c0_4 = arith.constant 0 : index
    %3 = vector.load %arg2[%c0_3, %c0_4] : memref<8x8xf32, #tpu.memory_space<vmem>>, vector<8x8xf32>
    %c16 = arith.constant 16 : index
    %c0_5 = arith.constant 0 : index
    %4 = vector.load %arg3[%c16, %c0_5] : memref<168x128xf32, #tpu.memory_space<vmem>>, vector<8x128xf32>
    %cst_6 = arith.constant dense<0.000000e+00> : vector<8x128xf32>
    %5 = tpu.matmul %3, %4, %cst_6 {dimension_numbers = #tpu.dot_dimension_numbers<[1], [0], [0], [1], [0, 0, 1, 1], [], []>} : vector<8x8xf32>, vector<8x128xf32>, vector<8x128xf32> -> vector<8x128xf32>
    %6 = arith.addf %2, %5 : vector<8x128xf32>
    %c24 = arith.constant 24 : index
    %c0_7 = arith.constant 0 : index
    %7 = vector.load %arg3[%c24, %c0_7] : memref<168x128xf32, #tpu.memory_space<vmem>>, vector<1x128xf32>
    %8 = vector.broadcast %7 : vector<1x128xf32> to vector<8x128xf32>
    %9 = arith.addf %6, %8 : vector<8x128xf32>
    %cst_8 = arith.constant 0.000000e+00 : f32
    %10 = vector.broadcast %cst_8 : f32 to vector<8x128xf32>
    %11 = arith.maximumf %9, %10 : vector<8x128xf32>
    %c32 = arith.constant 32 : index
    %c0_9 = arith.constant 0 : index
    %12 = vector.load %arg3[%c32, %c0_9] : memref<168x128xf32, #tpu.memory_space<vmem>>, vector<128x128xf32>
    %cst_10 = arith.constant dense<0.000000e+00> : vector<8x128xf32>
    %13 = tpu.matmul %11, %12, %cst_10 {dimension_numbers = #tpu.dot_dimension_numbers<[1], [0], [0], [1], [0, 0, 1, 1], [], []>} : vector<8x128xf32>, vector<128x128xf32>, vector<8x128xf32> -> vector<8x128xf32>
    %c160 = arith.constant 160 : index
    %c0_11 = arith.constant 0 : index
    %14 = vector.load %arg3[%c160, %c0_11] : memref<168x128xf32, #tpu.memory_space<vmem>>, vector<1x128xf32>
    %15 = vector.broadcast %14 : vector<1x128xf32> to vector<8x128xf32>
    %16 = arith.addf %13, %15 : vector<8x128xf32>
    %c0_12 = arith.constant 0 : index
    %c0_13 = arith.constant 0 : index
    %17 = vector.load %arg4[%c0_12, %c0_13] : memref<8x128xf32, #tpu.memory_space<vmem>>, vector<8x128xf32>
    tpu.vector_store %arg4[%c0_12, %c0_13], %16 {strides = array<i32>} : memref<8x128xf32, #tpu.memory_space<vmem>>, vector<8x128xf32>,
    return
  }
  func.func @transform_0(%arg0: i32) -> (i32, i32) {
    %c0_i32 = arith.constant 0 : i32
    %c0_i32_0 = arith.constant 0 : i32
    return %arg0, %c0_i32 : i32, i32
  }
  func.func @transform_1(%arg0: i32) -> (i32, i32) {
    %c0_i32 = arith.constant 0 : i32
    %c0_i32_0 = arith.constant 0 : i32
    return %arg0, %c0_i32 : i32, i32
  }
  func.func @transform_2(%arg0: i32) -> (i32, i32) {
    %c0_i32 = arith.constant 0 : i32
    %c0_i32_0 = arith.constant 0 : i32
    %c0_i32_1 = arith.constant 0 : i32
    return %c0_i32, %c0_i32_0 : i32, i32
  }
  func.func @transform_3(%arg0: i32) -> (i32, i32) {
    %c0_i32 = arith.constant 0 : i32
    %c0_i32_0 = arith.constant 0 : i32
    return %arg0, %c0_i32 : i32, i32
  }
}

</mosaic_0001>

<llo_original>
// kernel: tpu_custom_call.1
$region0: #{tpu_custom_call.1}
  #allocation0 [shape = 'u32[]', space=smem, size = 0x4, offset = 0x4, fixed_abs, tag = 'smem constant byte address 0x4 - core index']
  #allocation1 [shape = 'u32[72,128]{1,0:T(1,128)}', space=vmem, size = 0x9000, scoped, tag = 'internal scratch']
  %s0 = inlined_call_operand.hbm [shape: f32[8,16], index: 0, kind: input, shape index: {}]
  %s1 = inlined_call_operand.hbm [shape: f32[8,8], index: 1, kind: input, shape index: {}]
  %s2 = inlined_call_operand.hbm [shape: f32[168,128], index: 2, kind: input, shape index: {}]
  %s3 = inlined_call_operand.hbm [shape: f32[8,128], index: 3, kind: output, shape index: {}]
  %s4 = sld [smem:[#allocation0]]
  $region34: #{tpu_custom_call.1} parent=0
    _
  %s6 = ssub.s32 1, %s4
  %s7 = scalar_select 0, %s6, %s4
  $region1: #{tpu_custom_call.1} parent=0
    #allocation2 [shape = 'u8[4096]{0}', space=vmem, size = 0x1000, scoped, tag = 'input window, operand 0, single buffered']
    #allocation3 [shape = 's32[1]{0}', space=sflag, size = 0x4, scoped, tag = 'scoped memory for tpu_custom_call.1']
    #allocation4 [shape = 's32[1]{0}', space=sflag, size = 0x4, scoped, tag = 'scoped memory for tpu_custom_call.1']
    #allocation5 [shape = 'u8[4096]{0}', space=vmem, size = 0x1000, scoped, tag = 'input window, operand 1, single buffered']
    #allocation6 [shape = 's32[1]{0}', space=sflag, size = 0x4, scoped, tag = 'scoped memory for tpu_custom_call.1']
    #allocation7 [shape = 'u8[86016]{0}', space=vmem, size = 0x15000, scoped, tag = 'input window, operand 2, single buffered']
    #allocation8 [shape = 'u8[4096]{0}', space=vmem, size = 0x1000, scoped, tag = 'output window, operand 0, single buffered']
    %8 = vsyncpa [#allocation3], 0
    %9 = vsyncpa [#allocation6], 0
    %10 = vsyncpa [#allocation4], 0
    // Predicated region
    $region2: #{tpu_custom_call.1} parent=1 // pred_check
      _
    $region3: #{tpu_custom_call.1} parent=1 // pred_check_branch
      %12 = sbr.rel (0) target = $region5
    $region4: #{tpu_custom_call.1} parent=1 // pred_region
      %14 = vsyncadd [#allocation3], 0
      %s16 = sshll.u32 %s0, 4
      %s17 = int_to_ptr.hbm [resolvable:$true] %s16
      %s18 = sshll.u32 [#allocation2], 4
      %s19 = int_to_ptr.vmem [resolvable:$true] %s18
      %21 = dma.hbm_to_vmem [thread:$0]  %s17, 128, %s19, [#allocation3]
    $region5: #{tpu_custom_call.1} parent=1 // pred_fallthru
      _
    // Predicated region
    $region6: #{tpu_custom_call.1} parent=1 // pred_check
      _
    $region7: #{tpu_custom_call.1} parent=1 // pred_check_branch
      %23 = sbr.rel (0) target = $region9
    $region8: #{tpu_custom_call.1} parent=1 // pred_region
      %25 = vsyncadd [#allocation6], 0
      %s27 = sshll.u32 %s1, 4
      %s28 = int_to_ptr.hbm [resolvable:$true] %s27
      %s29 = sshll.u32 [#allocation5], 4
      %s30 = int_to_ptr.vmem [resolvable:$true] %s29
      %32 = dma.hbm_to_vmem [thread:$0]  %s28, 128, %s30, [#allocation6]
    $region9: #{tpu_custom_call.1} parent=1 // pred_fallthru
      _
    // Predicated region
    $region10: #{tpu_custom_call.1} parent=1 // pred_check
      _
    $region11: #{tpu_custom_call.1} parent=1 // pred_check_branch
      %34 = sbr.rel (0) target = $region13
    $region12: #{tpu_custom_call.1} parent=1 // pred_region
      %36 = vsyncadd [#allocation6], 0
      %s37 = sshll.u32 %s2, 4
      %s38 = int_to_ptr.hbm [resolvable:$true] %s37
      %s39 = sshll.u32 [#allocation7], 4
      %s40 = int_to_ptr.vmem [resolvable:$true] %s39
      %45 = dma.hbm_to_vmem [thread:$0]  %s38, 2688, %s40, [#allocation6], 128, 128, 8
    $region13: #{tpu_custom_call.1} parent=1 // pred_fallthru
      _
    // Predicated region
    $region14: #{tpu_custom_call.1} parent=1 // pred_check
      _
    $region15: #{tpu_custom_call.1} parent=1 // pred_check_branch
      %47 = sbr.rel (0) target = $region17
    $region16: #{tpu_custom_call.1} parent=1 // pred_region
      %49 = dma.done [#allocation3], 128
    $region17: #{tpu_custom_call.1} parent=1 // pred_fallthru
      _
    // Predicated region
    $region18: #{tpu_custom_call.1} parent=1 // pred_check
      _
    $region19: #{tpu_custom_call.1} parent=1 // pred_check_branch
      %51 = sbr.rel (0) target = $region21
    $region20: #{tpu_custom_call.1} parent=1 // pred_region
      %53 = dma.done [#allocation6], 128
    $region21: #{tpu_custom_call.1} parent=1 // pred_fallthru
      _
    // Predicated region
    $region22: #{tpu_custom_call.1} parent=1 // pred_check
      _
    $region23: #{tpu_custom_call.1} parent=1 // pred_check_branch
      %55 = sbr.rel (0) target = $region25
    $region24: #{tpu_custom_call.1} parent=1 // pred_region
      %57 = dma.done [#allocation6], 2688
    $region25: #{tpu_custom_call.1} parent=1 // pred_fallthru
      _
    %v58 = vld [vmem:[#allocation2] sm:$0xff]
    %v59 = vld [vmem:[#allocation7] sm:$0xff]
    %v60 = vld [vmem:[#allocation7 + $0x8] sm:$0xff]
    %v61 = vld [vmem:[#allocation5] sm:$0xff]
    %v62 = vld [vmem:[#allocation7 + $0x10] sm:$0xff]
    %vm63 = vcmask 64512
    %v65 = vsel %vm63, %v61, 0
    %67 = vmatpush.msra.mxu0 0.0
    %68 = vmatpush.msra.mxu0 0.0
    %69 = vmatpush.msra.mxu0 0.0
    %70 = vmatpush.msra.mxu0 0.0
    %71 = vmatpush.msra.mxu0 0.0
    %72 = vmatpush.msra.mxu0 0.0
    %73 = vmatpush.msra.mxu0 0.0
    %74 = vmatpush.msra.mxu0 0.0
    %75 = vmatpush.msra.mxu0 0.0
    %76 = vmatpush.msra.mxu0 0.0
    %77 = vmatpush.msra.mxu0 0.0
    %78 = vmatpush.msra.mxu0 0.0
    %79 = vmatpush.msra.mxu0 0.0
    %80 = vmatpush.msra.mxu0 0.0
    %81 = vmatpush.msra.mxu0 0.0
    %82 = vmatpush.msra.mxu0 %v62
    %83 = vmatmul.f32.gmra.mxu0 %v65
    %v84 = vpop.f32.mrf.mxu0
    %v85 = vadd.f32 0.0, %v84
    %86 = vdwg.mxu0
    %vm87 = vcmask 130048
    %v89 = vsel %vm87, %v58, 0
    %91 = vmatpush.msra.mxu0 0.0
    %92 = vmatpush.msra.mxu0 0.0
    %93 = vmatpush.msra.mxu0 0.0
    %94 = vmatpush.msra.mxu0 0.0
    %95 = vmatpush.msra.mxu0 0.0
    %96 = vmatpush.msra.mxu0 0.0
    %97 = vmatpush.msra.mxu0 0.0
    %98 = vmatpush.msra.mxu0 0.0
    %99 = vmatpush.msra.mxu0 0.0
    %100 = vmatpush.msra.mxu0 0.0
    %101 = vmatpush.msra.mxu0 0.0
    %102 = vmatpush.msra.mxu0 0.0
    %103 = vmatpush.msra.mxu0 0.0
    %104 = vmatpush.msra.mxu0 0.0
    %105 = vmatpush.msra.mxu0 %v60
    %106 = vmatpush.msra.mxu0 %v59
    %107 = vmatmul.f32.gmra.mxu0 %v89
    %v108 = vpop.f32.mrf.mxu0
    %v109 = vadd.f32 %v85, %v108
    %110 = vdwg.mxu0
    %v111 = vld [vmem:[#allocation7 + $0x18] sm:$0x1]
    %v112 = vperm.slane %v111, 0
    %v113 = vadd.f32 %v109, %v112
    %v114 = vmax.f32 %v113, 0.0
    %v115 = vld [vmem:[#allocation7 + $0x20] sm:$0xff]
    %v116 = vld [vmem:[#allocation7 + $0x28] sm:$0xff]
    %v117 = vld [vmem:[#allocation7 + $0x30] sm:$0xff]
    %v118 = vld [vmem:[#allocation7 + $0x38] sm:$0xff]
    %v119 = vld [vmem:[#allocation7 + $0x40] sm:$0xff]
    %v120 = vld [vmem:[#allocation7 + $0x48] sm:$0xff]
    %v121 = vld [vmem:[#allocation7 + $0x50] sm:$0xff]
    %v122 = vld [vmem:[#allocation7 + $0x58] sm:$0xff]
    %v123 = vld [vmem:[#allocation7 + $0x60] sm:$0xff]
    %v124 = vld [vmem:[#allocation7 + $0x68] sm:$0xff]
    %v125 = vld [vmem:[#allocation7 + $0x70] sm:$0xff]
    %v126 = vld [vmem:[#allocation7 + $0x78] sm:$0xff]
    %v127 = vld [vmem:[#allocation7 + $0x80] sm:$0xff]
    %v128 = vld [vmem:[#allocation7 + $0x88] sm:$0xff]
    %v129 = vld [vmem:[#allocation7 + $0x90] sm:$0xff]
    %v130 = vld [vmem:[#allocation7 + $0x98] sm:$0xff]
    %v131 = vld [vmem:[#allocation7 + $0xa0] sm:$0x1]
    %v132 = vperm.slane %v131, 0
    %133 = vmatpush.msra.mxu0 %v130
    %134 = vmatpush.msra.mxu0 %v129
    %135 = vmatpush.msra.mxu0 %v128
    %136 = vmatpush.msra.mxu0 %v127
    %137 = vmatpush.msra.mxu0 %v126
    %138 = vmatpush.msra.mxu0 %v125
    %139 = vmatpush.msra.mxu0 %v124
    %140 = vmatpush.msra.mxu0 %v123
    %141 = vmatpush.msra.mxu0 %v122
    %142 = vmatpush.msra.mxu0 %v121
    %143 = vmatpush.msra.mxu0 %v120
    %144 = vmatpush.msra.mxu0 %v119
    %145 = vmatpush.msra.mxu0 %v118
    %146 = vmatpush.msra.mxu0 %v117
    %147 = vmatpush.msra.mxu0 %v116
    %148 = vmatpush.msra.mxu0 %v115
    %149 = vmatmul.f32.gmra.mxu0 %v114
    %v150 = vpop.f32.mrf.mxu0
    %v151 = vadd.f32 %v132, %v150
    %152 = vdwg.mxu0
    %153 = vst [vmem:[#allocation8] sm:$0xff] %v151
    // Predicated region
    $region26: #{tpu_custom_call.1} parent=1 // pred_check
      _
    $region27: #{tpu_custom_call.1} parent=1 // pred_check_branch
      %155 = sbr.rel (0) target = $region29
    $region28: #{tpu_custom_call.1} parent=1 // pred_region
      %157 = vsyncadd [#allocation4], 0
      %s159 = sshll.u32 [#allocation8], 4
      %s160 = int_to_ptr.vmem [resolvable:$true] %s159
      %s161 = sshll.u32 %s3, 4
      %s162 = int_to_ptr.hbm [resolvable:$true] %s161
      %164 = dma.vmem_to_hbm [thread:$0]  %s160, 128, %s162, [#allocation4]
    $region29: #{tpu_custom_call.1} parent=1 // pred_fallthru
      _
    // Predicated region
    $region30: #{tpu_custom_call.1} parent=1 // pred_check
      _
    $region31: #{tpu_custom_call.1} parent=1 // pred_check_branch
      %166 = sbr.rel (0) target = $region33
    $region32: #{tpu_custom_call.1} parent=1 // pred_region
      %168 = dma.done [#allocation4], 128
    $region33: #{tpu_custom_call.1} parent=1 // pred_fallthru
      _
    %169 = vsyncpa [#allocation3], 1
    %170 = vsyncpa [#allocation6], 1
    %171 = vsyncpa [#allocation4], 1

</llo_original>
